<compile_context>
chip_gen: v7x
topology: tpu7x:2x2x1
jax: 0.10.0
libtpu: 0.0.40
codegen_flags: <defaults>
</compile_context>

<pallas_src>
from functools import partial

import jax
import jax.numpy as jnp
from jax.experimental import pallas as pl
from jax.experimental.pallas import tpu as pltpu


def _round_up(a, b):
    return (a + b - 1) // b * b


def _relukan_kernel(x_ref, plo_ref, phi_ref, w_ref, b_ref, o_ref, *,
                    gk, compute_dtype, mxu_dtype):
    # x_ref:   (TB, C)        input batch tile (f32, streamed per grid step)
    # plo_ref: (1, gk*C)      phase_low,  flat m-major (index m*C + c)
    # phi_ref: (1, gk*C)      phase_high, flat m-major
    # w_ref:   (gk*C, O_pad)  repacked conv weight (r folded in), mxu dtype
    # b_ref:   (1, O_pad)     conv bias (f32)
    # o_ref:   (TB, O_pad)    output tile (f32)
    x = x_ref[...]                                         # (TB, C) f32
    # Replicate the C channels gk times along lanes -> flat index m*C + c,
    # the same order as the repacked weight rows.  Static lane concat; the
    # elementwise basis math then runs on full 128-lane vregs.
    x_rep = jnp.concatenate([x] * gk, axis=-1).astype(compute_dtype)  # (TB, gk*C)
    x1 = jnp.maximum(x_rep - plo_ref[...], 0)              # VPU
    x2 = jnp.maximum(phi_ref[...] - x_rep, 0)
    feat = (x_rep * x1 * x2).astype(mxu_dtype)             # r folded into W
    out = jnp.dot(feat, w_ref[...], preferred_element_type=jnp.float32)
    o_ref[...] = (out + b_ref[...]).astype(o_ref.dtype)


def prepare_relukan_params(phase_low, phase_high, conv_w, conv_b, *, g, k,
                           mxu_dtype=jnp.bfloat16, compute_dtype=jnp.bfloat16):
    """One-time parameter repacking (do at load time, not per forward call).

    mxu_dtype:     matmul operand dtype.  bf16 is the production default;
                   f32 is a validation-only path (far slower on v6e/v7x).
    compute_dtype: basis (relu/product) dtype.  Keep f32 on v5e (no bf16 VPU).
    """
    gk = g + k
    C = phase_low.shape[0]
    O = conv_w.shape[0]
    r = 4.0 * g * g / ((k + 1) * (k + 1))

    # Conv2d(1, O, kernel=(gk, C)) over the raw-reshaped phi is a dot product
    # against conv_w flattened row-major over (gk, C).  Regroup so that
    # W[m*C + c, o] multiplies phi[b, c, m]:
    #   W[m*C + c, o] = conv_w.reshape(O, gk*C)[o, c*gk + m]
    w_flat = jnp.asarray(conv_w, jnp.float32).reshape(O, gk * C)
    w3 = jnp.transpose(w_flat.reshape(O, C, gk), (2, 1, 0))     # (gk, C, O)
    w3 = w3 * jnp.float32(r)                                    # fold scalar r
    w2 = w3.reshape(gk * C, O)                                  # row = m*C + c

    # Pad output channels to a lane-dense multiple of 128 (unmasked stores,
    # full MXU column fill).  No-op if O is already lane-dense.
    O_pad = _round_up(O, 128)
    if O_pad != O:
        w2 = jnp.pad(w2, ((0, 0), (0, O_pad - O)))
        bias = jnp.pad(jnp.asarray(conv_b, jnp.float32), (0, O_pad - O))
    else:
        bias = jnp.asarray(conv_b, jnp.float32)
    w2 = w2.astype(mxu_dtype)
    bias = bias.reshape(1, O_pad)

    # Phases transposed to (gk, C) then flattened m-major -> (1, gk*C),
    # matching feat's lane order inside the kernel.
    plo = jnp.asarray(phase_low, jnp.float32).T.reshape(1, gk * C)
    phi = jnp.asarray(phase_high, jnp.float32).T.reshape(1, gk * C)
    return dict(plo=plo.astype(compute_dtype), phi=phi.astype(compute_dtype),
                w=w2, b=bias, gk=gk, C=C, out_channels=O, O_pad=O_pad,
                compute_dtype=compute_dtype, mxu_dtype=mxu_dtype)


def _choose_batch_tile(B, block_b, min_steps):
    """Pick (TB, B_pad): TB multiple of 8, <= block_b.  Prefer exact divisors
    of B (no input padding) and a grid of >= min_steps steps (>= 2 per v7x
    TensorCore) before growing the tile further."""
    block_b = max(8, block_b)
    divisors = [tb for tb in range(8, min(block_b, B) + 1, 8) if B % tb == 0]
    good = [tb for tb in divisors if B // tb >= min_steps]
    if good:
        return max(good), B
    if divisors:                       # B too small for min_steps: most steps
        return min(divisors), B
    # No multiple-of-8 divisor of B: fall back to padding the batch.
    tb = min(block_b, max(8, _round_up(-(-B // min_steps), 8)))
    return tb, _round_up(B, tb)


def relukan_forward(x, params, *, block_b=512, min_steps=8, keep_padded=False):
    """x: (B, C) f32 -> (B, out_channels) f32  (or (B, O_pad) if keep_padded)."""
    B, C = x.shape
    assert C == params["C"], "channel mismatch"
    gk = params["gk"]
    O = params["out_channels"]
    O_pad = params["O_pad"]
    gkC = gk * C
    w, bias, plo, phi = params["w"], params["b"], params["plo"], params["phi"]

    TB, B_pad = _choose_batch_tile(B, block_b, min_steps)
    if B_pad != B:                       # avoided whenever B has a /8 divisor
        x = jnp.pad(x, ((0, B_pad - B), (0, 0)))
    grid = (B_pad // TB,)

    # Raise the scoped-VMEM ceiling only when needed (v5e default is 16 MiB);
    # stay under v7x's 64 MiB physical VMEM.  Conservatively assume every
    # operand is double-buffered by the pipeline.
    need = 2 * (TB * C * 4 + TB * O_pad * 4
                + gkC * O_pad * w.dtype.itemsize
                + 2 * gkC * plo.dtype.itemsize + O_pad * 4)
    cp = dict(dimension_semantics=("parallel",))
    if need > (12 << 20):
        cp["vmem_limit_bytes"] = int(min(need + (4 << 20), 64 << 20))
    # TODO(synk): for resident weights approaching v7x's 64 MiB VMEM, add a
    # reduction grid axis over gk*C with a VMEM accumulator and single-buffer
    # the constant specs (pipeline_mode=pl.Buffered(1)); unnecessary at these
    # sizes.

    kernel = partial(_relukan_kernel, gk=gk,
                     compute_dtype=params["compute_dtype"],
                     mxu_dtype=params["mxu_dtype"])
    out = pl.pallas_call(
        kernel,
        out_shape=jax.ShapeDtypeStruct((B_pad, O_pad), jnp.float32),
        grid=grid,
        in_specs=[
            pl.BlockSpec((TB, C), lambda i: (i, 0)),       # streamed per step
            pl.BlockSpec((1, gkC), lambda i: (0, 0)),      # VMEM-resident
            pl.BlockSpec((1, gkC), lambda i: (0, 0)),
            pl.BlockSpec((gkC, O_pad), lambda i: (0, 0)),
            pl.BlockSpec((1, O_pad), lambda i: (0, 0)),
        ],
        out_specs=pl.BlockSpec((TB, O_pad), lambda i: (i, 0)),
        compiler_params=pltpu.CompilerParams(**cp),
    )(x, plo, phi, w, bias)

    if B_pad != B:
        out = out[:B]
    if O_pad != O and not keep_padded:
        # Set keep_padded=True to hand the lane-dense (B, O_pad) layout to the
        # downstream consumer and skip this extra HBM pass.
        out = out[:, :O]
    return out


def relukan_reference(x, phase_low, phase_high, conv_w, conv_b, *, g, k):
    """Pure-JAX reference mirroring the PyTorch forward exactly."""
    B, C = x.shape
    gk = g + k
    O = conv_w.shape[0]
    r = 4.0 * g * g / ((k + 1) * (k + 1))
    x3 = x[:, :, None]                                   # (B, C, 1)
    x1 = jax.nn.relu(x3 - phase_low[None])               # (B, C, gk)
    x2 = jax.nn.relu(phase_high[None] - x3)              # (B, C, gk)
    phi = x3 * x1 * x2 * r                               # (B, C, gk)
    phi_flat = phi.reshape(B, C * gk)                    # == torch raw reshape
    w = conv_w.reshape(O, C * gk)                        # == torch raw flatten
    return phi_flat @ w.T + conv_b[None, :]


if __name__ == "__main__":
    in_channels = 16
    out_channels = 32
    g, k = 5, 3          # g + k = 8  ->  gk*C = 128 (one full lane group)
    batch = 256          # 8 grid steps at the chosen tile (exercises pipeline)
    gk = g + k

    key = jax.random.PRNGKey(0)
    kx, kw, kb = jax.random.split(key, 3)

    # Input.
    x = jax.random.uniform(kx, (batch, in_channels), dtype=jnp.float32)

    # Parameters (deterministic synthetic init, shapes per nn.Module.__init__).
    phase_low_1d = jnp.arange(-k, g, dtype=jnp.float32) / g          # (g+k,)
    phase_high_1d = phase_low_1d + (k + 1) / g
    phase_low = jnp.broadcast_to(phase_low_1d[None, :], (in_channels, gk))
    phase_high = jnp.broadcast_to(phase_high_1d[None, :], (in_channels, gk))

    fan_in = gk * in_channels
    bound = 1.0 / (fan_in ** 0.5)
    conv_w = jax.random.uniform(kw, (out_channels, 1, gk, in_channels),
                                dtype=jnp.float32, minval=-bound, maxval=bound)
    conv_b = jax.random.uniform(kb, (out_channels,), dtype=jnp.float32,
                                minval=-bound, maxval=bound)

    ref = relukan_reference(x, phase_low, phase_high, conv_w, conv_b, g=g, k=k)

    # Exact validation path: f32 MXU operands, f32 basis math.
    params_f32 = prepare_relukan_params(phase_low, phase_high, conv_w, conv_b,
                                        g=g, k=k, mxu_dtype=jnp.float32,
                                        compute_dtype=jnp.float32)
    out_f32 = jax.block_until_ready(relukan_forward(x, params_f32))
    assert out_f32.shape == (batch, out_channels)
    assert jnp.allclose(out_f32, ref, atol=1e-4, rtol=1e-4), "f32 mismatch vs reference"

    # Production path: bf16 MXU operands + bf16 basis math, f32 accumulation.
    params_bf16 = prepare_relukan_params(phase_low, phase_high, conv_w, conv_b,
                                         g=g, k=k)
    out_bf16 = jax.block_until_ready(relukan_forward(x, params_bf16))
    assert out_bf16.shape == (batch, out_channels)
    assert jnp.allclose(out_bf16, ref, atol=5e-2, rtol=5e-2), "bf16 mismatch vs reference"

    print("KERNEL_OK")
</pallas_src>

<mosaic_0001>
module attributes {stable_mosaic.version = 11 : i64} {
  func.func @_relukan_kernel(%arg0: i32, %arg1: memref<32x16xf32, #tpu.memory_space<vmem>>, %arg2: memref<1x128xf32, #tpu.memory_space<vmem>>, %arg3: memref<1x128xf32, #tpu.memory_space<vmem>>, %arg4: memref<128x128xf32, #tpu.memory_space<vmem>>, %arg5: memref<1x128xf32, #tpu.memory_space<vmem>>, %arg6: memref<32x128xf32, #tpu.memory_space<vmem>>) attributes {dimension_semantics = [#tpu.dimension_semantics<parallel>], iteration_bounds = array<i64: 8>, scalar_prefetch = 0 : i64, scratch_operands = 0 : i64, tpu.core_type = #tpu.core_type<tc>, window_params = [{transform_indices = @transform_0, window_bounds = array<i64: 32, 16>}, {pipeline_mode = #tpu.pipeline_mode<synchronous>, transform_indices = @transform_1, window_bounds = array<i64: 1, 128>}, {pipeline_mode = #tpu.pipeline_mode<synchronous>, transform_indices = @transform_2, window_bounds = array<i64: 1, 128>}, {pipeline_mode = #tpu.pipeline_mode<synchronous>, transform_indices = @transform_3, window_bounds = array<i64: 128, 128>}, {pipeline_mode = #tpu.pipeline_mode<synchronous>, transform_indices = @transform_4, window_bounds = array<i64: 1, 128>}, {transform_indices = @transform_5, window_bounds = array<i64: 32, 128>}]} {
    %c0 = arith.constant 0 : index
    %c0_0 = arith.constant 0 : index
    %0 = vector.load %arg1[%c0, %c0_0] : memref<32x16xf32, #tpu.memory_space<vmem>>, vector<32x16xf32>
    %1 = tpu.concatenate %0, %0, %0, %0, %0, %0, %0, %0 in 1 : vector<32x16xf32>, vector<32x16xf32>, vector<32x16xf32>, vector<32x16xf32>, vector<32x16xf32>, vector<32x16xf32>, vector<32x16xf32>, vector<32x16xf32> -> vector<32x128xf32>
    %c0_1 = arith.constant 0 : index
    %c0_2 = arith.constant 0 : index
    %2 = vector.load %arg2[%c0_1, %c0_2] : memref<1x128xf32, #tpu.memory_space<vmem>>, vector<1x128xf32>
    %3 = vector.broadcast %2 : vector<1x128xf32> to vector<32x128xf32>
    %4 = arith.subf %1, %3 : vector<32x128xf32>
    %cst = arith.constant 0.000000e+00 : f32
    %5 = vector.broadcast %cst : f32 to vector<32x128xf32>
    %6 = arith.maximumf %4, %5 : vector<32x128xf32>
    %c0_3 = arith.constant 0 : index
    %c0_4 = arith.constant 0 : index
    %7 = vector.load %arg3[%c0_3, %c0_4] : memref<1x128xf32, #tpu.memory_space<vmem>>, vector<1x128xf32>
    %8 = vector.broadcast %7 : vector<1x128xf32> to vector<32x128xf32>
    %9 = arith.subf %8, %1 : vector<32x128xf32>
    %cst_5 = arith.constant 0.000000e+00 : f32
    %10 = vector.broadcast %cst_5 : f32 to vector<32x128xf32>
    %11 = arith.maximumf %9, %10 : vector<32x128xf32>
    %12 = arith.mulf %1, %6 : vector<32x128xf32>
    %13 = arith.mulf %12, %11 : vector<32x128xf32>
    %c0_6 = arith.constant 0 : index
    %c0_7 = arith.constant 0 : index
    %14 = vector.load %arg4[%c0_6, %c0_7] : memref<128x128xf32, #tpu.memory_space<vmem>>, vector<128x128xf32>
    %cst_8 = arith.constant dense<0.000000e+00> : vector<32x128xf32>
    %15 = tpu.matmul %13, %14, %cst_8 {dimension_numbers = #tpu.dot_dimension_numbers<[1], [0], [0], [1], [0, 0, 1, 1], [], []>} : vector<32x128xf32>, vector<128x128xf32>, vector<32x128xf32> -> vector<32x128xf32>
    %c0_9 = arith.constant 0 : index
    %c0_10 = arith.constant 0 : index
    %16 = vector.load %arg5[%c0_9, %c0_10] : memref<1x128xf32, #tpu.memory_space<vmem>>, vector<1x128xf32>
    %17 = vector.broadcast %16 : vector<1x128xf32> to vector<32x128xf32>
    %18 = arith.addf %15, %17 : vector<32x128xf32>
    %c0_11 = arith.constant 0 : index
    %c0_12 = arith.constant 0 : index
    %19 = vector.load %arg6[%c0_11, %c0_12] : memref<32x128xf32, #tpu.memory_space<vmem>>, vector<32x128xf32>
    tpu.vector_store %arg6[%c0_11, %c0_12], %18 {strides = array<i32>} : memref<32x128xf32, #tpu.memory_space<vmem>>, vector<32x128xf32>,
    return
  }
  func.func @transform_0(%arg0: i32) -> (i32, i32) {
    %c0_i32 = arith.constant 0 : i32
    %c0_i32_0 = arith.constant 0 : i32
    return %arg0, %c0_i32 : i32, i32
  }
  func.func @transform_1(%arg0: i32) -> (i32, i32) {
    %c0_i32 = arith.constant 0 : i32
    %c0_i32_0 = arith.constant 0 : i32
    %c0_i32_1 = arith.constant 0 : i32
    return %c0_i32, %c0_i32_0 : i32, i32
  }
  func.func @transform_2(%arg0: i32) -> (i32, i32) {
    %c0_i32 = arith.constant 0 : i32
    %c0_i32_0 = arith.constant 0 : i32
    %c0_i32_1 = arith.constant 0 : i32
    return %c0_i32, %c0_i32_0 : i32, i32
  }
  func.func @transform_3(%arg0: i32) -> (i32, i32) {
    %c0_i32 = arith.constant 0 : i32
    %c0_i32_0 = arith.constant 0 : i32
    %c0_i32_1 = arith.constant 0 : i32
    return %c0_i32, %c0_i32_0 : i32, i32
  }
  func.func @transform_4(%arg0: i32) -> (i32, i32) {
    %c0_i32 = arith.constant 0 : i32
    %c0_i32_0 = arith.constant 0 : i32
    %c0_i32_1 = arith.constant 0 : i32
    return %c0_i32, %c0_i32_0 : i32, i32
  }
  func.func @transform_5(%arg0: i32) -> (i32, i32) {
    %c0_i32 = arith.constant 0 : i32
    %c0_i32_0 = arith.constant 0 : i32
    return %arg0, %c0_i32 : i32, i32
  }
}

</mosaic_0001>

<llo_original>
// kernel: tpu_custom_call.1
$region0: #{tpu_custom_call.1}
  #allocation0 [shape = 'u32[]', space=smem, size = 0x4, offset = 0x4, fixed_abs, tag = 'smem constant byte address 0x4 - core index']
  #allocation1 [shape = 'u32[144,128]{1,0:T(1,128)}', space=vmem, size = 0x12000, scoped, tag = 'internal scratch']
  %s0 = inlined_call_operand.vmem [shape: f32[256,16], index: 0, kind: input, shape index: {}]
  %s1 = inlined_call_operand.vmem [shape: f32[1,128], index: 1, kind: input, shape index: {}]
  %s2 = inlined_call_operand.vmem [shape: f32[1,128], index: 2, kind: input, shape index: {}]
  %s3 = inlined_call_operand.vmem [shape: f32[128,128], index: 3, kind: input, shape index: {}]
  %s4 = inlined_call_operand.vmem [shape: f32[1,128], index: 4, kind: input, shape index: {}]
  %s5 = inlined_call_operand.hbm [shape: f32[256,128], index: 5, kind: output, shape index: {}]
  %s6 = sld [smem:[#allocation0]]
  $region53: #{tpu_custom_call.1} parent=0
    _
  %s8 = ssub.s32 1, %s6
  %s9 = scalar_select 0, %s8, %s6
  $region1: #{tpu_custom_call.1} parent=0
    #allocation2 [shape = 'u8[32768]{0}', space=vmem, size = 0x8000, scoped, tag = 'output window, operand 0']
    #allocation3 [shape = 's32[2]{0}', space=sflag, size = 0x8, scoped, tag = 'scoped memory for tpu_custom_call.1']
    %10 = vsyncpa [#allocation3], 0
    %s11 = scalar_lea.sflag [#allocation3], 1
    %12 = vsyncpa %s11, 0
    loop: start=0, step=1, limit=10
    $region2: #{tpu_custom_call.1} parent=1 // loop_pre_header
      _
    $region3: #{tpu_custom_call.1} parent=1 // loop_header
      %s14 = sphi 0, %s18
      %p15 = scmp.ge.s32.totalorder %s14, 10
      %s24 = sphi 0, %s26
      %s27 = sphi 0, %s24
      %s28 = sphi 0, %s27
      %s44 = sphi 0, %s28
      %s48 = sphi 0, %s48
      %s50 = sphi 0, %s48
      %s51 = sphi 0, %s50
      %s65 = sphi 0, %s51
      %s69 = sphi 0, %s69
      %s71 = sphi 0, %s69
      %s72 = sphi 0, %s71
      %s86 = sphi 0, %s72
      %s90 = sphi 0, %s90
      %s92 = sphi 0, %s90
      %s93 = sphi 0, %s92
      %s107 = sphi 0, %s93
      %s111 = sphi 0, %s111
      %s113 = sphi 0, %s111
      %s114 = sphi 0, %s113
      %s128 = sphi 0, %s114
      %s134 = sphi 0, %s136
      %s137 = sphi 0, %s134
      %s138 = sphi 0, %s137
      %s154 = sphi 0, %s138
    $region4: #{tpu_custom_call.1} parent=1 // loop_header_branch
      %17 = sbr.rel (%p15) target = $region8
    $region5: #{tpu_custom_call.1} parent=1 // loop_body
      %s19 = ssub.s32 %s14, 1
      %s20 = ssub.s32 %s14, 2
      %s21 = sadd.s32 %s14, 1
      %s22 = ssub.s32 %s14, %s21
      %p23 = scmp.eq.s32.totalorder %s22, 0
      %s25 = sadd.s32 %s24, 1
      %s26 = scalar_select %p23, %s24, %s25
      %p29 = pneg %p23
      %p30 = scmp.eq.s32.totalorder %s14, 7
      %p31 = por %p29, %p30
      %p32 = scmp.ne.s32.totalorder %s24, %s27
      %p33 = scmp.eq.s32.totalorder %s14, 0
      %p34 = por %p32, %p33
      %p35 = scmp.ne.s32.totalorder %s24, %s27
      %p36 = scmp.eq.s32.totalorder %s19, 7
      %p37 = por %p35, %p36
      %p38 = scmp.ne.s32.totalorder %s27, %s28
      %p39 = scmp.eq.s32.totalorder %s19, 0
      %p40 = por %p38, %p39
      %p41 = scmp.ne.s32.totalorder %s27, %s28
      %p42 = scmp.eq.s32.totalorder %s20, 7
      %p43 = por %p41, %p42
      %p45 = scmp.ne.s32.totalorder %s28, %s44
      %p46 = scmp.eq.s32.totalorder %s20, 0
      %p47 = por %p45, %p46
      %s49 = sadd.s32 %s48, 1
      %p52 = scmp.eq.s32.totalorder %s14, 7
      %p53 = scmp.ne.s32.totalorder %s48, %s50
      %p54 = scmp.eq.s32.totalorder %s14, 0
      %p55 = por %p53, %p54
      %p56 = scmp.ne.s32.totalorder %s48, %s50
      %p57 = scmp.eq.s32.totalorder %s19, 7
      %p58 = por %p56, %p57
      %p59 = scmp.ne.s32.totalorder %s50, %s51
      %p60 = scmp.eq.s32.totalorder %s19, 0
      %p61 = por %p59, %p60
      %p62 = scmp.ne.s32.totalorder %s50, %s51
      %p63 = scmp.eq.s32.totalorder %s20, 7
      %p64 = por %p62, %p63
      %p66 = scmp.ne.s32.totalorder %s51, %s65
      %p67 = scmp.eq.s32.totalorder %s20, 0
      %p68 = por %p66, %p67
      %s70 = sadd.s32 %s69, 1
      %p73 = scmp.eq.s32.totalorder %s14, 7
      %p74 = scmp.ne.s32.totalorder %s69, %s71
      %p75 = scmp.eq.s32.totalorder %s14, 0
      %p76 = por %p74, %p75
      %p77 = scmp.ne.s32.totalorder %s69, %s71
      %p78 = scmp.eq.s32.totalorder %s19, 7
      %p79 = por %p77, %p78
      %p80 = scmp.ne.s32.totalorder %s71, %s72
      %p81 = scmp.eq.s32.totalorder %s19, 0
      %p82 = por %p80, %p81
      %p83 = scmp.ne.s32.totalorder %s71, %s72
      %p84 = scmp.eq.s32.totalorder %s20, 7
      %p85 = por %p83, %p84
      %p87 = scmp.ne.s32.totalorder %s72, %s86
      %p88 = scmp.eq.s32.totalorder %s20, 0
      %p89 = por %p87, %p88
      %s91 = sadd.s32 %s90, 1
      %p94 = scmp.eq.s32.totalorder %s14, 7
      %p95 = scmp.ne.s32.totalorder %s90, %s92
      %p96 = scmp.eq.s32.totalorder %s14, 0
      %p97 = por %p95, %p96
      %p98 = scmp.ne.s32.totalorder %s90, %s92
      %p99 = scmp.eq.s32.totalorder %s19, 7
      %p100 = por %p98, %p99
      %p101 = scmp.ne.s32.totalorder %s92, %s93
      %p102 = scmp.eq.s32.totalorder %s19, 0
      %p103 = por %p101, %p102
      %p104 = scmp.ne.s32.totalorder %s92, %s93
      %p105 = scmp.eq.s32.totalorder %s20, 7
      %p106 = por %p104, %p105
      %p108 = scmp.ne.s32.totalorder %s93, %s107
      %p109 = scmp.eq.s32.totalorder %s20, 0
      %p110 = por %p108, %p109
      %s112 = sadd.s32 %s111, 1
      %p115 = scmp.eq.s32.totalorder %s14, 7
      %p116 = scmp.ne.s32.totalorder %s111, %s113
      %p117 = scmp.eq.s32.totalorder %s14, 0
      %p118 = por %p116, %p117
      %p119 = scmp.ne.s32.totalorder %s111, %s113
      %p120 = scmp.eq.s32.totalorder %s19, 7
      %p121 = por %p119, %p120
      %p122 = scmp.ne.s32.totalorder %s113, %s114
      %p123 = scmp.eq.s32.totalorder %s19, 0
      %p124 = por %p122, %p123
      %p125 = scmp.ne.s32.totalorder %s113, %s114
      %p126 = scmp.eq.s32.totalorder %s20, 7
      %p127 = por %p125, %p126
      %p129 = scmp.ne.s32.totalorder %s114, %s128
      %p130 = scmp.eq.s32.totalorder %s20, 0
      %p131 = por %p129, %p130
      %s132 = ssub.s32 %s14, %s21
      %p133 = scmp.eq.s32.totalorder %s132, 0
      %s135 = sadd.s32 %s134, 1
      %s136 = scalar_select %p133, %s134, %s135
      %p139 = pneg %p133
      %p140 = scmp.eq.s32.totalorder %s14, 7
      %p141 = por %p139, %p140
      %p142 = scmp.ne.s32.totalorder %s134, %s137
      %p143 = scmp.eq.s32.totalorder %s14, 0
      %p144 = por %p142, %p143
      %p145 = scmp.ne.s32.totalorder %s134, %s137
      %p146 = scmp.eq.s32.totalorder %s19, 7
      %p147 = por %p145, %p146
      %p148 = scmp.ne.s32.totalorder %s137, %s138
      %p149 = scmp.eq.s32.totalorder %s19, 0
      %p150 = por %p148, %p149
      %p151 = scmp.ne.s32.totalorder %s137, %s138
      %p152 = scmp.eq.s32.totalorder %s20, 7
      %p153 = por %p151, %p152
      %p155 = scmp.ne.s32.totalorder %s138, %s154
      %p156 = scmp.eq.s32.totalorder %s20, 0
      %p157 = por %p155, %p156
      %p158 = scmp.le.s32.totalorder 1, %s14
      %p159 = scmp.lt.s32.totalorder %s14, 9
      %p160 = pnand %p158, %p159
      %p161 = pneg %p160
      // Predicated region
      $region9: #{tpu_custom_call.1} parent=5 // pred_check
        _
      $region10: #{tpu_custom_call.1} parent=5 // pred_check_branch
        %163 = sbr.rel (%p160) target = $region12
      $region11: #{tpu_custom_call.1} parent=5 // pred_region
        %s164 = ssub.s32 %s14, 1
        // Predicated region
        $region13: #{tpu_custom_call.1} parent=11 // pred_check
          %p165 = pneg %p61
        $region14: #{tpu_custom_call.1} parent=11 // pred_check_branch
          %167 = sbr.rel (%p165) target = $region16
        $region15: #{tpu_custom_call.1} parent=11 // pred_region
          _
        $region16: #{tpu_custom_call.1} parent=11 // pred_fallthru
          _
        // Predicated region
        $region17: #{tpu_custom_call.1} parent=11 // pred_check
          %p168 = pneg %p82
        $region18: #{tpu_custom_call.1} parent=11 // pred_check_branch
          %170 = sbr.rel (%p168) target = $region20
        $region19: #{tpu_custom_call.1} parent=11 // pred_region
          _
        $region20: #{tpu_custom_call.1} parent=11 // pred_fallthru
          _
        // Predicated region
        $region21: #{tpu_custom_call.1} parent=11 // pred_check
          %p171 = pneg %p103
        $region22: #{tpu_custom_call.1} parent=11 // pred_check_branch
          %173 = sbr.rel (%p171) target = $region24
        $region23: #{tpu_custom_call.1} parent=11 // pred_region
          _
        $region24: #{tpu_custom_call.1} parent=11 // pred_fallthru
          _
        // Predicated region
        $region25: #{tpu_custom_call.1} parent=11 // pred_check
          %p174 = pneg %p124
        $region26: #{tpu_custom_call.1} parent=11 // pred_check_branch
          %176 = sbr.rel (%p174) target = $region28
        $region27: #{tpu_custom_call.1} parent=11 // pred_region
          _
        $region28: #{tpu_custom_call.1} parent=11 // pred_fallthru
          _
      $region12: #{tpu_custom_call.1} parent=5 // pred_fallthru
        _
      %p177 = scmp.lt.s32.totalorder %s14, 8
      // Predicated region
      $region29: #{tpu_custom_call.1} parent=5 // pred_check
        %p178 = pneg %p177
      $region30: #{tpu_custom_call.1} parent=5 // pred_check_branch
        %180 = sbr.rel (%p178) target = $region32
      $region31: #{tpu_custom_call.1} parent=5 // pred_region
        // Predicated region
        $region33: #{tpu_custom_call.1} parent=31 // pred_check
          %p181 = pneg %p34
        $region34: #{tpu_custom_call.1} parent=31 // pred_check_branch
          %183 = sbr.rel (%p181) target = $region36
        $region35: #{tpu_custom_call.1} parent=31 // pred_region
          %s184 = smul.u32 4, %s14
          %p185 = scmp.lt.s32.totalorder %s184, 31
          %s186 = scalar_select %p185, %s184, 31
          %s187 = smul.addr %s186, 8
          %s188 = scalar_lea.vmem %s0, %s187
          %s189 = smul.u32 4, %s14
        $region36: #{tpu_custom_call.1} parent=31 // pred_fallthru
          _
      $region32: #{tpu_custom_call.1} parent=5 // pred_fallthru
        _
      %p190 = scmp.le.s32.totalorder 1, %s14
      %p191 = scmp.lt.s32.totalorder %s14, 9
      %p192 = pnand %p190, %p191
      %p193 = pneg %p192
      // Predicated region
      $region37: #{tpu_custom_call.1} parent=5 // pred_check
        _
      $region38: #{tpu_custom_call.1} parent=5 // pred_check_branch
        %195 = sbr.rel (%p192) target = $region40
      $region39: #{tpu_custom_call.1} parent=5 // pred_region
        %s196 = ssub.s32 %s14, 1
        %s197 = smul.u32 4, %s19
        %p198 = scmp.lt.s32.totalorder %s197, 31
        %s199 = scalar_select %p198, %s197, 31
        %s200 = smul.addr %s199, 8
        %s201 = scalar_lea.vmem %s0, %s200
        %p202 = pneg %p40
        %p203 = pneg %p37
        %p204 = pneg %p61
        %p205 = pneg %p58
        %p206 = pneg %p82
        %p207 = pneg %p79
        %p208 = pneg %p103
        %p209 = pneg %p100
        %p210 = pneg %p124
        %p211 = pneg %p121
        %p212 = pneg %p150
        %p213 = pneg %p147
        %s214 = sand.u32 %s137, 1
        %s215 = scalar_lea.sflag [#allocation3], %s214
        %s216 = sand.u32 %s137, 1
        %s217 = smul.addr %s216, 32
        %s218 = scalar_lea.vmem [#allocation2], %s217
        %s219 = smul.u32 4, %s19
        %p220 = scmp.lt.s32.totalorder %s219, 31
        %s221 = scalar_select %p220, %s219, 31
        %s222 = smul.addr %s221, 8
        %s223 = scalar_lea.vmem %s0, %s222
        %s224 = smul.u32 4, %s19
        %s225 = smul.u32 4, %s19
        %v226 = vld [vmem:[%s223] sm:$0xff]
        %v227 = vld [vmem:[%s223 + $0x8] sm:$0xff]
        %v228 = vld [vmem:[%s223 + $0x10] sm:$0xff]
        %v229 = vld [vmem:[%s223 + $0x18] sm:$0xff]
        %234 = vrot.lane.b32.xlu0 %v226, 16
        %v235 = vpop.permute.xlu0 %234
        %236 = vrot.lane.b32.xlu0 %v227, 16
        %v237 = vpop.permute.xlu0 %236
        %238 = vrot.lane.b32.xlu0 %v228, 16
        %v239 = vpop.permute.xlu0 %238
        %240 = vrot.lane.b32.xlu0 %v229, 16
        %v241 = vpop.permute.xlu0 %240
        %246 = vrot.lane.b32.xlu0 %v226, 32
        %v247 = vpop.permute.xlu0 %246
        %248 = vrot.lane.b32.xlu0 %v227, 32
        %v249 = vpop.permute.xlu0 %248
        %250 = vrot.lane.b32.xlu0 %v228, 32
        %v251 = vpop.permute.xlu0 %250
        %252 = vrot.lane.b32.xlu0 %v229, 32
        %v253 = vpop.permute.xlu0 %252
        %258 = vrot.lane.b32.xlu0 %v226, 48
        %v259 = vpop.permute.xlu0 %258
        %260 = vrot.lane.b32.xlu0 %v227, 48
        %v261 = vpop.permute.xlu0 %260
        %262 = vrot.lane.b32.xlu0 %v228, 48
        %v263 = vpop.permute.xlu0 %262
        %264 = vrot.lane.b32.xlu0 %v229, 48
        %v265 = vpop.permute.xlu0 %264
        %270 = vrot.lane.b32.xlu0 %v226, 64
        %v271 = vpop.permute.xlu0 %270
        %272 = vrot.lane.b32.xlu0 %v227, 64
        %v273 = vpop.permute.xlu0 %272
        %274 = vrot.lane.b32.xlu0 %v228, 64
        %v275 = vpop.permute.xlu0 %274
        %276 = vrot.lane.b32.xlu0 %v229, 64
        %v277 = vpop.permute.xlu0 %276
        %282 = vrot.lane.b32.xlu0 %v226, 80
        %v283 = vpop.permute.xlu0 %282
        %284 = vrot.lane.b32.xlu0 %v227, 80
        %v285 = vpop.permute.xlu0 %284
        %286 = vrot.lane.b32.xlu0 %v228, 80
        %v287 = vpop.permute.xlu0 %286
        %288 = vrot.lane.b32.xlu0 %v229, 80
        %v289 = vpop.permute.xlu0 %288
        %294 = vrot.lane.b32.xlu0 %v226, 96
        %v295 = vpop.permute.xlu0 %294
        %296 = vrot.lane.b32.xlu0 %v227, 96
        %v297 = vpop.permute.xlu0 %296
        %298 = vrot.lane.b32.xlu0 %v228, 96
        %v299 = vpop.permute.xlu0 %298
        %300 = vrot.lane.b32.xlu0 %v229, 96
        %v301 = vpop.permute.xlu0 %300
        %306 = vrot.lane.b32.xlu0 %v226, 112
        %v307 = vpop.permute.xlu0 %306
        %308 = vrot.lane.b32.xlu0 %v227, 112
        %v309 = vpop.permute.xlu0 %308
        %310 = vrot.lane.b32.xlu0 %v228, 112
        %v311 = vpop.permute.xlu0 %310
        %312 = vrot.lane.b32.xlu0 %v229, 112
        %v313 = vpop.permute.xlu0 %312
        %vm318 = vcmask 130048
        %v319 = vsel %vm318, %v226, %v235
        %v320 = vsel %vm318, %v227, %v237
        %v321 = vsel %vm318, %v228, %v239
        %v322 = vsel %vm318, %v229, %v241
        %vm323 = vcmask 261120
        %v324 = vsel %vm323, %v319, %v247
        %v325 = vsel %vm323, %v320, %v249
        %v326 = vsel %vm323, %v321, %v251
        %v327 = vsel %vm323, %v322, %v253
        %vm328 = vcmask 392192
        %v329 = vsel %vm328, %v324, %v259
        %v330 = vsel %vm328, %v325, %v261
        %v331 = vsel %vm328, %v326, %v263
        %v332 = vsel %vm328, %v327, %v265
        %vm333 = vcmask 523264
        %v334 = vsel %vm333, %v329, %v271
        %v335 = vsel %vm333, %v330, %v273
        %v336 = vsel %vm333, %v331, %v275
        %v337 = vsel %vm333, %v332, %v277
        %vm338 = vcmask 654336
        %v339 = vsel %vm338, %v334, %v283
        %v340 = vsel %vm338, %v335, %v285
        %v341 = vsel %vm338, %v336, %v287
        %v342 = vsel %vm338, %v337, %v289
        %vm343 = vcmask 785408
        %v344 = vsel %vm343, %v339, %v295
        %v345 = vsel %vm343, %v340, %v297
        %v346 = vsel %vm343, %v341, %v299
        %v347 = vsel %vm343, %v342, %v301
        %vm348 = vcmask 916480
        %v349 = vsel %vm348, %v344, %v307
        %v350 = vsel %vm348, %v345, %v309
        %v351 = vsel %vm348, %v346, %v311
        %v352 = vsel %vm348, %v347, %v313
        %v353 = vld [vmem:[%s1] sm:$0x1]
        %v355 = vlaneseq
        %v356 = vshrl.u32 %v355, 7
        %v357 = vsub.s32 0, %v356
        %v358 = vrot.slane %v353, %v357
        %v360 = vsub.f32 %v349, %v358
        %v361 = vsub.f32 %v350, %v358
        %v362 = vsub.f32 %v351, %v358
        %v363 = vsub.f32 %v352, %v358
        %v364 = vmax.f32 %v360, 0.0
        %v365 = vmax.f32 %v361, 0.0
        %v366 = vmax.f32 %v362, 0.0
        %v367 = vmax.f32 %v363, 0.0
        %v368 = vld [vmem:[%s2] sm:$0x1]
        %v370 = vlaneseq
        %v371 = vshrl.u32 %v370, 7
        %v372 = vsub.s32 0, %v371
        %v373 = vrot.slane %v368, %v372
        %v375 = vsub.f32 %v373, %v349
        %v376 = vsub.f32 %v373, %v350
        %v377 = vsub.f32 %v373, %v351
        %v378 = vsub.f32 %v373, %v352
        %v379 = vmax.f32 %v375, 0.0
        %v380 = vmax.f32 %v376, 0.0
        %v381 = vmax.f32 %v377, 0.0
        %v382 = vmax.f32 %v378, 0.0
        %v383 = vmul.f32 %v349, %v364
        %v384 = vmul.f32 %v350, %v365
        %v385 = vmul.f32 %v351, %v366
        %v386 = vmul.f32 %v352, %v367
        %v387 = vmul.f32 %v383, %v379
        %v388 = vmul.f32 %v384, %v380
        %v389 = vmul.f32 %v385, %v381
        %v390 = vmul.f32 %v386, %v382
        %v391 = vld [vmem:[%s3] sm:$0xff]
        %v392 = vld [vmem:[%s3 + $0x8] sm:$0xff]
        %v393 = vld [vmem:[%s3 + $0x10] sm:$0xff]
        %v394 = vld [vmem:[%s3 + $0x18] sm:$0xff]
        %v395 = vld [vmem:[%s3 + $0x20] sm:$0xff]
        %v396 = vld [vmem:[%s3 + $0x28] sm:$0xff]
        %v397 = vld [vmem:[%s3 + $0x30] sm:$0xff]
        %v398 = vld [vmem:[%s3 + $0x38] sm:$0xff]
        %v399 = vld [vmem:[%s3 + $0x40] sm:$0xff]
        %v400 = vld [vmem:[%s3 + $0x48] sm:$0xff]
        %v401 = vld [vmem:[%s3 + $0x50] sm:$0xff]
        %v402 = vld [vmem:[%s3 + $0x58] sm:$0xff]
        %v403 = vld [vmem:[%s3 + $0x60] sm:$0xff]
        %v404 = vld [vmem:[%s3 + $0x68] sm:$0xff]
        %v405 = vld [vmem:[%s3 + $0x70] sm:$0xff]
        %v406 = vld [vmem:[%s3 + $0x78] sm:$0xff]
        %v407 = vld [vmem:[%s4] sm:$0x1]
        %v409 = vlaneseq
        %v410 = vshrl.u32 %v409, 7
        %v411 = vsub.s32 0, %v410
        %v412 = vrot.slane %v407, %v411
        %414 = vmatprep.subr.mxu0 0.0
        %415 = vmatpush1.msra.mxu0 %v391
        %416 = vmatprep.subr.mxu0 0.0
        %417 = vmatpush1.msra.mxu0 %v392
        %418 = vmatprep.subr.mxu0 0.0
        %419 = vmatpush1.msra.mxu0 %v393
        %420 = vmatprep.subr.mxu0 0.0
        %421 = vmatpush1.msra.mxu0 %v394
        %422 = vmatprep.subr.mxu0 0.0
        %423 = vmatpush1.msra.mxu0 %v395
        %424 = vmatprep.subr.mxu0 0.0
        %425 = vmatpush1.msra.mxu0 %v396
        %426 = vmatprep.subr.mxu0 0.0
        %427 = vmatpush1.msra.mxu0 %v397
        %428 = vmatprep.subr.mxu0 0.0
        %429 = vmatpush1.msra.mxu0 %v398
        %430 = vmatprep.subr.mxu0 0.0
        %431 = vmatpush1.msra.mxu0 %v399
        %432 = vmatprep.subr.mxu0 0.0
        %433 = vmatpush1.msra.mxu0 %v400
        %434 = vmatprep.subr.mxu0 0.0
        %435 = vmatpush1.msra.mxu0 %v401
        %436 = vmatprep.subr.mxu0 0.0
        %437 = vmatpush1.msra.mxu0 %v402
        %438 = vmatprep.subr.mxu0 0.0
        %439 = vmatpush1.msra.mxu0 %v403
        %440 = vmatprep.subr.mxu0 0.0
        %441 = vmatpush1.msra.mxu0 %v404
        %442 = vmatprep.subr.mxu0 0.0
        %443 = vmatpush1.msra.mxu0 %v405
        %444 = vmatprep.subr.mxu0 0.0
        %445 = vmatpush1.msra.mxu0 %v406
        %446 = vmatprep.subr.mxu0 0.0
        %447 = vmatpush1.msra.mxu0 0.0
        %448 = vmatprep.subr.mxu0 0.0
        %449 = vmatpush1.msra.mxu0 0.0
        %450 = vmatprep.subr.mxu0 0.0
        %451 = vmatpush1.msra.mxu0 0.0
        %452 = vmatprep.subr.mxu0 0.0
        %453 = vmatpush1.msra.mxu0 0.0
        %454 = vmatprep.subr.mxu0 0.0
        %455 = vmatpush1.msra.mxu0 0.0
        %456 = vmatprep.subr.mxu0 0.0
        %457 = vmatpush1.msra.mxu0 0.0
        %458 = vmatprep.subr.mxu0 0.0
        %459 = vmatpush1.msra.mxu0 0.0
        %460 = vmatprep.subr.mxu0 0.0
        %461 = vmatpush1.msra.mxu0 0.0
        %462 = vmatprep.subr.mxu0 0.0
        %463 = vmatpush1.msra.mxu0 0.0
        %464 = vmatprep.subr.mxu0 0.0
        %465 = vmatpush1.msra.mxu0 0.0
        %466 = vmatprep.subr.mxu0 0.0
        %467 = vmatpush1.msra.mxu0 0.0
        %468 = vmatprep.subr.mxu0 0.0
        %469 = vmatpush1.msra.mxu0 0.0
        %470 = vmatprep.subr.mxu0 0.0
        %471 = vmatpush1.msra.mxu0 0.0
        %472 = vmatprep.subr.mxu0 0.0
        %473 = vmatpush1.msra.mxu0 0.0
        %474 = vmatprep.subr.mxu0 0.0
        %475 = vmatpush1.msra.mxu0 0.0
        %476 = vmatprep.subr.mxu0 0.0
        %477 = vmatpush1.msra.mxu0 0.0
        %478 = vmatprep.mubr.f32.mxu0 0.0
        %479 = vmatmul.mubr.f32.gmra.mrb[0].mxu0 %v387
        %v480 = vpop.f32.mrb[0].mxu0
        %v481 = vadd.f32 %v412, %v480
        %v482 = vpop.f32.mrb[0].mxu0
        %483 = vmatprep.mubr.f32.mxu0 0.0
        %484 = vmatmul.mubr.f32.gmra.mrb[0].mxu0 %v388
        %v485 = vpop.f32.mrb[0].mxu0
        %v486 = vadd.f32 %v412, %v485
        %v487 = vpop.f32.mrb[0].mxu0
        %488 = vmatprep.mubr.f32.mxu0 0.0
        %489 = vmatmul.mubr.f32.gmra.mrb[0].mxu0 %v389
        %v490 = vpop.f32.mrb[0].mxu0
        %v491 = vadd.f32 %v412, %v490
        %v492 = vpop.f32.mrb[0].mxu0
        %493 = vmatprep.mubr.f32.mxu0 0.0
        %494 = vmatmul.mubr.f32.gmra.mrb[0].mxu0 %v390
        %v495 = vpop.f32.mrb[0].mxu0
        %v496 = vadd.f32 %v412, %v495
        %v497 = vpop.f32.mrb[0].mxu0
        %498 = vdwg.mxu0
        %499 = vst [vmem:[%s218] sm:$0xff] %v481
        %500 = vst [vmem:[%s218 + $0x8] sm:$0xff] %v486
        %501 = vst [vmem:[%s218 + $0x10] sm:$0xff] %v491
        %502 = vst [vmem:[%s218 + $0x18] sm:$0xff] %v496
        %s503 = sand.u32 %s137, 1
        %s504 = scalar_lea.sflag [#allocation3], %s503
        %s505 = sand.u32 %s137, 1
        %s506 = smul.addr %s505, 32
        %s507 = scalar_lea.vmem [#allocation2], %s506
        // Predicated region
        $region41: #{tpu_custom_call.1} parent=39 // pred_check
          %p508 = pneg %p147
        $region42: #{tpu_custom_call.1} parent=39 // pred_check_branch
          %510 = sbr.rel (%p508) target = $region44
        $region43: #{tpu_custom_call.1} parent=39 // pred_region
          %s511 = smul.u32 4, %s19
          %s513 = ssub.s32 512, 512
          %514 = vsyncadd %s504, %s513
          %s515 = smul.addr %s511, 128
          %s516 = scalar_lea.hbm %s5, %s515
          %s517 = sshll.u32 %s507, 4
          %s518 = int_to_ptr.vmem [resolvable:$true] %s517
          %523 = dma.vmem_to_hbm [thread:$0]  %s518, 512, %s516, %s504, 128, 128, 8
        $region44: #{tpu_custom_call.1} parent=39 // pred_fallthru
          _
      $region40: #{tpu_custom_call.1} parent=5 // pred_fallthru
        _
      %p524 = scmp.le.s32.totalorder 2, %s14
      // Predicated region
      $region45: #{tpu_custom_call.1} parent=5 // pred_check
        %p525 = pneg %p524
      $region46: #{tpu_custom_call.1} parent=5 // pred_check_branch
        %527 = sbr.rel (%p525) target = $region48
      $region47: #{tpu_custom_call.1} parent=5 // pred_region
        %s528 = ssub.s32 %s14, 2
        // Predicated region
        $region49: #{tpu_custom_call.1} parent=47 // pred_check
          %p529 = pneg %p153
        $region50: #{tpu_custom_call.1} parent=47 // pred_check_branch
          %531 = sbr.rel (%p529) target = $region52
        $region51: #{tpu_custom_call.1} parent=47 // pred_region
          %s532 = sand.u32 %s138, 1
          %s533 = scalar_lea.sflag [#allocation3], %s532
          %s534 = sand.u32 %s138, 1
          %s535 = smul.addr %s534, 32
          %s536 = scalar_lea.vmem [#allocation2], %s535
          %537 = dma.done %s533, 512
        $region52: #{tpu_custom_call.1} parent=47 // pred_fallthru
          _
      $region48: #{tpu_custom_call.1} parent=5 // pred_fallthru
        _
    $region6: #{tpu_custom_call.1} parent=1 // loop_footer
      %s18 = sadd.s32 1, %s14
    $region7: #{tpu_custom_call.1} parent=1 // loop_footer_branch
      %13 = sbr.rel target = $region3
    $region8: #{tpu_custom_call.1} parent=1 // loop_exit
      _
    %538 = vsyncpa [#allocation3], 1
    %s539 = scalar_lea.sflag [#allocation3], 1
    %540 = vsyncpa %s539, 1

</llo_original>
